<compile_context>
chip_gen: v7x
topology: tpu7x:2x2x1
jax: 0.10.0
libtpu: 0.0.40
codegen_flags: <defaults>
</compile_context>

<pallas_src>
import functools

import jax
import jax.numpy as jnp
from jax import lax
from jax.experimental import pallas as pl
from jax.experimental.pallas import tpu as pltpu


def _round_up(x: int, m: int) -> int:
    return ((x + m - 1) // m) * m


@functools.lru_cache(maxsize=None)
def _vmem_capacity_bytes() -> int:
    """Per-core VMEM capacity; conservative (v7x-sized) fallback if unknown."""
    try:
        return int(pltpu.get_tpu_info().vmem_capacity_bytes)
    except Exception:
        return 64 * 1024 * 1024


_TN_CANDIDATES = (4096, 2048, 1024, 512, 256, 128)
_TM_CANDIDATES = (4096, 2048, 1024, 512, 256, 128, 64, 32, 16, 8)


def _choose_tiles(B: int, N: int, R: int, q_bytes: int, w_bytes: int):
    """Pick (tm, tn, vmem_limit): prefer a fully VMEM-resident batch tile
    (w2 and q each streamed once) and the largest lane-dense tn that fits."""
    out_bytes = 4  # f32 scores
    vmem_cap = _vmem_capacity_bytes()
    # Tile-picking budget (double-buffered tiles must fit with headroom).
    budget = min(int(0.55 * vmem_cap), 80 << 20)

    def need(tm, tn):
        return (2 * tm * R * q_bytes          # q tile (double-buffered)
                + 2 * tn * R * w_bytes        # w2 tile (double-buffered)
                + 2 * tm * tn * out_bytes)    # output tile (double-buffered)

    n_pad128 = _round_up(N, 128) if N > 128 else N
    tn_opts = [t for t in _TN_CANDIDATES if t <= n_pad128] or [n_pad128]
    tn_min = tn_opts[-1]

    # Prefer the whole (sublane-aligned) batch resident.
    tm_full = max(_round_up(B, 8), 8)
    if need(tm_full, tn_min) <= budget:
        tm = tm_full
    else:
        tm = next((t for t in _TM_CANDIDATES
                   if t < tm_full and need(t, tn_min) <= budget), 8)

    # Grow tn as large as the remaining budget allows (lane-dense output,
    # fewer re-streams of the q tiles when the batch is not fully resident).
    tn = next((t for t in tn_opts if need(tm, t) <= budget), tn_min)

    # Scoped-VMEM limit: ~96 MiB on v5e/v6e (128 MiB physical),
    # ~48 MiB per TensorCore on v7x (64 MiB physical).
    vmem_limit = int(min(int(0.75 * vmem_cap), 100 << 20))
    vmem_limit = max(vmem_limit, 32 << 20)
    return tm, tn, vmem_limit


def cp_matmul_kernel(q_ref, w_ref, out_ref):
    # q_ref  : (tm, R)  precomputed lhs*rel batch tile (storage dtype)
    # w_ref  : (tn, R)  tile of the rhs-entity embedding table
    # out_ref: (tm, tn) f32 score tile
    out_ref[...] = lax.dot_general(
        q_ref[...],
        w_ref[...],
        dimension_numbers=(((1,), (1,)), ((), ())),   # contract over R
        preferred_element_type=jnp.float32,
    ).astype(out_ref.dtype)


def cp_forward(q, w2):
    """scores = q @ w2.T, tiled so the entity table streams from HBM once."""
    B, R = q.shape
    N, R2 = w2.shape
    assert R == R2, (R, R2)

    q_bytes = jnp.dtype(q.dtype).itemsize
    w_bytes = jnp.dtype(w2.dtype).itemsize
    tm, tn, vmem_limit = _choose_tiles(B, N, R, q_bytes, w_bytes)

    # Pad to the tile grid (zero rows contribute nothing; sliced off below).
    B_pad = _round_up(B, tm)
    N_pad = _round_up(N, tn)
    if B_pad != B:
        q = jnp.pad(q, ((0, B_pad - B), (0, 0)))
    if N_pad != N:
        w2 = jnp.pad(w2, ((0, N_pad - N), (0, 0)))

    # Grid: entity axis OUTER, batch axis INNER -> the w2 tile's block index
    # is constant across the inner loop, so each w2 tile is DMA'd exactly once.
    grid = (N_pad // tn, B_pad // tm)

    scores = pl.pallas_call(
        cp_matmul_kernel,
        out_shape=jax.ShapeDtypeStruct((B_pad, N_pad), jnp.float32),
        grid_spec=pltpu.PrefetchScalarGridSpec(
            num_scalar_prefetch=0,
            grid=grid,
            in_specs=[
                pl.BlockSpec((tm, R), lambda j, i: (i, 0)),   # q batch tile
                pl.BlockSpec((tn, R), lambda j, i: (j, 0)),   # w2 tile (resident)
            ],
            out_specs=pl.BlockSpec((tm, tn), lambda j, i: (i, j)),
        ),
        compiler_params=pltpu.CompilerParams(
            # Both axes are independent; on v7x megacore the entity axis can
            # be sharded across the two TensorCores.
            dimension_semantics=("parallel", "parallel"),
            vmem_limit_bytes=vmem_limit,
        ),
    )(q, w2)

    if B_pad != B or N_pad != N:
        scores = scores[:B, :N]
    return scores


def cp_score(lhs, rel, rhs):
    # Tiny (B, R) reduction: a Pallas launch is pure overhead here.
    prod = (lhs.astype(jnp.float32) * rel.astype(jnp.float32)
            * rhs.astype(jnp.float32))
    return jnp.sum(prod, axis=1, keepdims=True)


@jax.jit
def _cp_forward_jit(emb0, emb1, emb2, x):
    lhs = jnp.take(emb0, x[:, 0], axis=0)
    rel = jnp.take(emb1, x[:, 1], axis=0)
    rhs = jnp.take(emb2, x[:, 2], axis=0)
    # Query product once, in f32 (v5e has no bf16 VALUs), then a single cast
    # to the weight-stream dtype for the MXU.
    q = (lhs.astype(jnp.float32) * rel.astype(jnp.float32)).astype(emb2.dtype)
    # TODO(synk): gathers/product stay in XLA (they don't fuse across the
    # custom call); traffic is O(B*R) and lhs/rel/rhs must be materialized for
    # the returned factors anyway.
    scores = cp_forward(q, emb2)
    return scores, (lhs, rel, rhs)


@jax.jit
def _cp_score_jit(emb0, emb1, emb2, x):
    lhs = jnp.take(emb0, x[:, 0], axis=0)
    rel = jnp.take(emb1, x[:, 1], axis=0)
    rhs = jnp.take(emb2, x[:, 2], axis=0)
    return cp_score(lhs, rel, rhs)


class CP:
    """JAX/Pallas port of the PyTorch CP model (forward + score paths)."""

    def __init__(self, sizes, rank, init_size=0.001, key=None, dtype=jnp.float32):
        self.sizes = sizes
        self.rank = rank
        key = jax.random.PRNGKey(0) if key is None else key
        k0, k1, k2 = jax.random.split(key, 3)
        # nn.Embedding default init ~ N(0,1), then scaled by init_size.
        self.emb0 = (jax.random.normal(k0, (sizes[0], rank), jnp.float32)
                     * init_size).astype(dtype)
        self.emb1 = (jax.random.normal(k1, (sizes[1], rank), jnp.float32)
                     * init_size).astype(dtype)
        self.emb2 = (jax.random.normal(k2, (sizes[2], rank), jnp.float32)
                     * init_size).astype(dtype)

    def forward(self, x):
        # x: int32 [B, 3] of (lhs_id, rel_id, rhs_id)
        return _cp_forward_jit(self.emb0, self.emb1, self.emb2, x)

    def score(self, x):
        return _cp_score_jit(self.emb0, self.emb1, self.emb2, x)


if __name__ == "__main__":
    # Small synthetic problem: 32 lhs entities, 16 relations, 256 rhs
    # entities, rank 32, batch of 8 triples.
    sizes = (32, 16, 256)
    rank = 32
    B = 8

    key = jax.random.PRNGKey(0)

    kx = jax.random.fold_in(key, 123)
    x = jnp.stack(
        [
            jax.random.randint(jax.random.fold_in(kx, 0), (B,), 0, sizes[0]),
            jax.random.randint(jax.random.fold_in(kx, 1), (B,), 0, sizes[1]),
            jax.random.randint(jax.random.fold_in(kx, 2), (B,), 0, sizes[2]),
        ],
        axis=1,
    ).astype(jnp.int32)

    # --- fp32 model: strict reference check --------------------------------
    model = CP(sizes, rank, init_size=0.001, key=key, dtype=jnp.float32)
    scores, (lhs, rel, rhs) = model.forward(x)
    targets = model.score(x)
    jax.block_until_ready((scores, lhs, rel, rhs, targets))

    ref_scores = (lhs * rel) @ model.emb2.T
    ref_targets = jnp.sum(lhs * rel * rhs, axis=1, keepdims=True)
    assert scores.shape == (B, sizes[2])
    assert targets.shape == (B, 1)
    assert jnp.allclose(scores, ref_scores, atol=1e-6, rtol=1e-5)
    assert jnp.allclose(targets, ref_targets, atol=1e-6, rtol=1e-5)

    # --- bf16 model: half the HBM bytes on the weight stream, f32 accum -----
    model_bf16 = CP(sizes, rank, init_size=0.001, key=key, dtype=jnp.bfloat16)
    scores_bf, (lhs_bf, rel_bf, rhs_bf) = model_bf16.forward(x)
    jax.block_until_ready(scores_bf)

    # Reference mirrors the kernel's dataflow: f32 product, one bf16 cast,
    # f32-accumulated contraction.
    q_bf = (lhs_bf.astype(jnp.float32) * rel_bf.astype(jnp.float32)
            ).astype(jnp.bfloat16)
    ref_scores_bf = jnp.einsum(
        "br,nr->bn", q_bf.astype(jnp.float32),
        model_bf16.emb2.astype(jnp.float32),
        precision=lax.Precision.HIGHEST,
    )
    assert scores_bf.dtype == jnp.float32
    assert jnp.allclose(scores_bf, ref_scores_bf, atol=1e-6, rtol=2e-2)

    # --- padded-shape path: exercises B/N not divisible by the tile grid ----
    sizes_odd = (32, 16, 200)   # N=200 -> padded to a 128-multiple tile grid
    model_odd = CP(sizes_odd, rank, init_size=0.001, key=key, dtype=jnp.float32)
    x_odd = jnp.stack(
        [
            jax.random.randint(jax.random.fold_in(kx, 3), (5,), 0, sizes_odd[0]),
            jax.random.randint(jax.random.fold_in(kx, 4), (5,), 0, sizes_odd[1]),
            jax.random.randint(jax.random.fold_in(kx, 5), (5,), 0, sizes_odd[2]),
        ],
        axis=1,
    ).astype(jnp.int32)
    scores_odd, (lhs_o, rel_o, _) = model_odd.forward(x_odd)
    jax.block_until_ready(scores_odd)
    ref_odd = (lhs_o * rel_o) @ model_odd.emb2.T
    assert scores_odd.shape == (5, sizes_odd[2])
    assert jnp.allclose(scores_odd, ref_odd, atol=1e-6, rtol=1e-5)

    print("KERNEL_OK")
</pallas_src>

<mosaic_0001>
module attributes {stable_mosaic.version = 11 : i64} {
  func.func @cp_matmul_kernel(%arg0: i32, %arg1: i32, %arg2: memref<8x32xf32, #tpu.memory_space<vmem>>, %arg3: memref<256x32xf32, #tpu.memory_space<vmem>>, %arg4: memref<8x256xf32, #tpu.memory_space<vmem>>) attributes {dimension_semantics = [#tpu.dimension_semantics<parallel>, #tpu.dimension_semantics<parallel>], iteration_bounds = array<i64: 1, 1>, scalar_prefetch = 0 : i64, scratch_operands = 0 : i64, tpu.core_type = #tpu.core_type<tc>, window_params = [{transform_indices = @transform_0, window_bounds = array<i64: 8, 32>}, {transform_indices = @transform_1, window_bounds = array<i64: 256, 32>}, {transform_indices = @transform_2, window_bounds = array<i64: 8, 256>}]} {
    %c0 = arith.constant 0 : index
    %c0_0 = arith.constant 0 : index
    %0 = vector.load %arg2[%c0, %c0_0] : memref<8x32xf32, #tpu.memory_space<vmem>>, vector<8x32xf32>
    %c0_1 = arith.constant 0 : index
    %c0_2 = arith.constant 0 : index
    %1 = vector.load %arg3[%c0_1, %c0_2] : memref<256x32xf32, #tpu.memory_space<vmem>>, vector<256x32xf32>
    %cst = arith.constant dense<0.000000e+00> : vector<8x256xf32>
    %2 = tpu.matmul %0, %1, %cst {dimension_numbers = #tpu.dot_dimension_numbers<[1], [1], [0], [0], [0, 0, 1, 0], [], []>} : vector<8x32xf32>, vector<256x32xf32>, vector<8x256xf32> -> vector<8x256xf32>
    %c0_3 = arith.constant 0 : index
    %c0_4 = arith.constant 0 : index
    %3 = vector.load %arg4[%c0_3, %c0_4] : memref<8x256xf32, #tpu.memory_space<vmem>>, vector<8x256xf32>
    tpu.vector_store %arg4[%c0_3, %c0_4], %2 {strides = array<i32>} : memref<8x256xf32, #tpu.memory_space<vmem>>, vector<8x256xf32>,
    return
  }
  func.func @transform_0(%arg0: i32, %arg1: i32) -> (i32, i32) {
    %c0_i32 = arith.constant 0 : i32
    %c0_i32_0 = arith.constant 0 : i32
    return %arg1, %c0_i32 : i32, i32
  }
  func.func @transform_1(%arg0: i32, %arg1: i32) -> (i32, i32) {
    %c0_i32 = arith.constant 0 : i32
    %c0_i32_0 = arith.constant 0 : i32
    return %arg0, %c0_i32 : i32, i32
  }
  func.func @transform_2(%arg0: i32, %arg1: i32) -> (i32, i32) {
    %c0_i32 = arith.constant 0 : i32
    return %arg1, %arg0 : i32, i32
  }
}

</mosaic_0001>

<llo_original>
// kernel: _cp_forward_jit.1
$region0: #{_cp_forward_jit.1}
  #allocation0 [shape = 'u32[]', space=smem, size = 0x4, offset = 0x4, fixed_abs, tag = 'smem constant byte address 0x4 - core index']
  #allocation1 [shape = 'u32[144,128]{1,0:T(1,128)}', space=vmem, size = 0x12000, scoped, tag = 'internal scratch']
  %s0 = inlined_call_operand.vmem [shape: f32[8,32], index: 0, kind: input, shape index: {}]
  %s1 = inlined_call_operand.vmem [shape: f32[256,32], index: 1, kind: input, shape index: {}]
  %s2 = inlined_call_operand.hbm [shape: f32[8,256], index: 2, kind: output, shape index: {}]
  %s3 = sld [smem:[#allocation0]]
  $region18: #{_cp_forward_jit.1} parent=0
    _
  %s5 = ssub.s32 1, %s3
  %s6 = scalar_select 0, %s5, %s3
  $region1: #{_cp_forward_jit.1} parent=0
    #allocation2 [shape = 'u8[8192]{0}', space=vmem, size = 0x2000, scoped, tag = 'output window, operand 0, single buffered']
    #allocation3 [shape = 's32[1]{0}', space=sflag, size = 0x4, scoped, tag = 'scoped memory for _cp_forward_jit.1']
    %7 = vsyncpa [#allocation3], 0
    // Predicated region
    $region2: #{_cp_forward_jit.1} parent=1 // pred_check
      _
    $region3: #{_cp_forward_jit.1} parent=1 // pred_check_branch
      %9 = sbr.rel (0) target = $region5
    $region4: #{_cp_forward_jit.1} parent=1 // pred_region
      _
    $region5: #{_cp_forward_jit.1} parent=1 // pred_fallthru
      _
    // Predicated region
    $region6: #{_cp_forward_jit.1} parent=1 // pred_check
      _
    $region7: #{_cp_forward_jit.1} parent=1 // pred_check_branch
      %11 = sbr.rel (0) target = $region9
    $region8: #{_cp_forward_jit.1} parent=1 // pred_region
      _
    $region9: #{_cp_forward_jit.1} parent=1 // pred_fallthru
      _
    %v12 = vld [vmem:[%s0] sm:$0xff]
    %v13 = vld [vmem:[%s1] sm:$0xff]
    %v14 = vld [vmem:[%s1 + $0x8] sm:$0xff]
    %v15 = vld [vmem:[%s1 + $0x10] sm:$0xff]
    %v16 = vld [vmem:[%s1 + $0x18] sm:$0xff]
    %v17 = vld [vmem:[%s1 + $0x20] sm:$0xff]
    %v18 = vld [vmem:[%s1 + $0x28] sm:$0xff]
    %v19 = vld [vmem:[%s1 + $0x30] sm:$0xff]
    %v20 = vld [vmem:[%s1 + $0x38] sm:$0xff]
    %v21 = vld [vmem:[%s1 + $0x40] sm:$0xff]
    %v22 = vld [vmem:[%s1 + $0x48] sm:$0xff]
    %v23 = vld [vmem:[%s1 + $0x50] sm:$0xff]
    %v24 = vld [vmem:[%s1 + $0x58] sm:$0xff]
    %v25 = vld [vmem:[%s1 + $0x60] sm:$0xff]
    %v26 = vld [vmem:[%s1 + $0x68] sm:$0xff]
    %v27 = vld [vmem:[%s1 + $0x70] sm:$0xff]
    %v28 = vld [vmem:[%s1 + $0x78] sm:$0xff]
    %v29 = vld [vmem:[%s1 + $0x80] sm:$0xff]
    %v30 = vld [vmem:[%s1 + $0x88] sm:$0xff]
    %v31 = vld [vmem:[%s1 + $0x90] sm:$0xff]
    %v32 = vld [vmem:[%s1 + $0x98] sm:$0xff]
    %v33 = vld [vmem:[%s1 + $0xa0] sm:$0xff]
    %v34 = vld [vmem:[%s1 + $0xa8] sm:$0xff]
    %v35 = vld [vmem:[%s1 + $0xb0] sm:$0xff]
    %v36 = vld [vmem:[%s1 + $0xb8] sm:$0xff]
    %v37 = vld [vmem:[%s1 + $0xc0] sm:$0xff]
    %v38 = vld [vmem:[%s1 + $0xc8] sm:$0xff]
    %v39 = vld [vmem:[%s1 + $0xd0] sm:$0xff]
    %v40 = vld [vmem:[%s1 + $0xd8] sm:$0xff]
    %v41 = vld [vmem:[%s1 + $0xe0] sm:$0xff]
    %v42 = vld [vmem:[%s1 + $0xe8] sm:$0xff]
    %v43 = vld [vmem:[%s1 + $0xf0] sm:$0xff]
    %v44 = vld [vmem:[%s1 + $0xf8] sm:$0xff]
    %vm45 = vcmask 261120
    %v47 = vsel %vm45, %v12, 0
    %v50 = vsel %vm45, %v13, 0
    %v53 = vsel %vm45, %v14, 0
    %v56 = vsel %vm45, %v15, 0
    %v59 = vsel %vm45, %v16, 0
    %v62 = vsel %vm45, %v17, 0
    %v65 = vsel %vm45, %v18, 0
    %v68 = vsel %vm45, %v19, 0
    %v71 = vsel %vm45, %v20, 0
    %v74 = vsel %vm45, %v21, 0
    %v77 = vsel %vm45, %v22, 0
    %v80 = vsel %vm45, %v23, 0
    %v83 = vsel %vm45, %v24, 0
    %v86 = vsel %vm45, %v25, 0
    %v89 = vsel %vm45, %v26, 0
    %v92 = vsel %vm45, %v27, 0
    %v95 = vsel %vm45, %v28, 0
    %v98 = vsel %vm45, %v29, 0
    %v101 = vsel %vm45, %v30, 0
    %v104 = vsel %vm45, %v31, 0
    %v107 = vsel %vm45, %v32, 0
    %v110 = vsel %vm45, %v33, 0
    %v113 = vsel %vm45, %v34, 0
    %v116 = vsel %vm45, %v35, 0
    %v119 = vsel %vm45, %v36, 0
    %v122 = vsel %vm45, %v37, 0
    %v125 = vsel %vm45, %v38, 0
    %v128 = vsel %vm45, %v39, 0
    %v131 = vsel %vm45, %v40, 0
    %v134 = vsel %vm45, %v41, 0
    %v137 = vsel %vm45, %v42, 0
    %v140 = vsel %vm45, %v43, 0
    %v143 = vsel %vm45, %v44, 0
    %145 = vmatprep.subr.mxu0 0.0
    %146 = vmatpush1.xpose.msra.mxu0 %v50
    %147 = vmatprep.subr.mxu0 0.0
    %148 = vmatpush1.xpose.msra.mxu0 %v53
    %149 = vmatprep.subr.mxu0 0.0
    %150 = vmatpush1.xpose.msra.mxu0 %v56
    %151 = vmatprep.subr.mxu0 0.0
    %152 = vmatpush1.xpose.msra.mxu0 %v59
    %153 = vmatprep.subr.mxu0 0.0
    %154 = vmatpush1.xpose.msra.mxu0 %v62
    %155 = vmatprep.subr.mxu0 0.0
    %156 = vmatpush1.xpose.msra.mxu0 %v65
    %157 = vmatprep.subr.mxu0 0.0
    %158 = vmatpush1.xpose.msra.mxu0 %v68
    %159 = vmatprep.subr.mxu0 0.0
    %160 = vmatpush1.xpose.msra.mxu0 %v71
    %161 = vmatprep.subr.mxu0 0.0
    %162 = vmatpush1.xpose.msra.mxu0 %v74
    %163 = vmatprep.subr.mxu0 0.0
    %164 = vmatpush1.xpose.msra.mxu0 %v77
    %165 = vmatprep.subr.mxu0 0.0
    %166 = vmatpush1.xpose.msra.mxu0 %v80
    %167 = vmatprep.subr.mxu0 0.0
    %168 = vmatpush1.xpose.msra.mxu0 %v83
    %169 = vmatprep.subr.mxu0 0.0
    %170 = vmatpush1.xpose.msra.mxu0 %v86
    %171 = vmatprep.subr.mxu0 0.0
    %172 = vmatpush1.xpose.msra.mxu0 %v89
    %173 = vmatprep.subr.mxu0 0.0
    %174 = vmatpush1.xpose.msra.mxu0 %v92
    %175 = vmatprep.subr.mxu0 0.0
    %176 = vmatpush1.xpose.msra.mxu0 %v95
    %177 = vmatprep.subr.mxu0 0.0
    %178 = vmatpush1.xpose.msra.mxu0 %v98
    %179 = vmatprep.subr.mxu0 0.0
    %180 = vmatpush1.xpose.msra.mxu0 %v101
    %181 = vmatprep.subr.mxu0 0.0
    %182 = vmatpush1.xpose.msra.mxu0 %v104
    %183 = vmatprep.subr.mxu0 0.0
    %184 = vmatpush1.xpose.msra.mxu0 %v107
    %185 = vmatprep.subr.mxu0 0.0
    %186 = vmatpush1.xpose.msra.mxu0 %v110
    %187 = vmatprep.subr.mxu0 0.0
    %188 = vmatpush1.xpose.msra.mxu0 %v113
    %189 = vmatprep.subr.mxu0 0.0
    %190 = vmatpush1.xpose.msra.mxu0 %v116
    %191 = vmatprep.subr.mxu0 0.0
    %192 = vmatpush1.xpose.msra.mxu0 %v119
    %193 = vmatprep.subr.mxu0 0.0
    %194 = vmatpush1.xpose.msra.mxu0 %v122
    %195 = vmatprep.subr.mxu0 0.0
    %196 = vmatpush1.xpose.msra.mxu0 %v125
    %197 = vmatprep.subr.mxu0 0.0
    %198 = vmatpush1.xpose.msra.mxu0 %v128
    %199 = vmatprep.subr.mxu0 0.0
    %200 = vmatpush1.xpose.msra.mxu0 %v131
    %201 = vmatprep.subr.mxu0 0.0
    %202 = vmatpush1.xpose.msra.mxu0 %v134
    %203 = vmatprep.subr.mxu0 0.0
    %204 = vmatpush1.xpose.msra.mxu0 %v137
    %205 = vmatprep.subr.mxu0 0.0
    %206 = vmatpush1.xpose.msra.mxu0 %v140
    %207 = vmatprep.subr.mxu0 0.0
    %208 = vmatpush1.xpose.msra.mxu0 %v143
    %209 = vmatprep.mubr.f32.mxu0 0.0
    %210 = vmatmul.mubr.f32.gmra.mrb[0].mxu0 %v47
    %v211 = vpop.f32.mrb[0].mxu0
    %v212 = vadd.f32 0.0, %v211
    %v213 = vpop.f32.mrb[0].mxu0
    %v214 = vadd.f32 0.0, %v213
    %215 = vdwg.mxu0
    %216 = vst [vmem:[#allocation2] sm:$0xff] %v212
    %217 = vst [vmem:[#allocation2 + $0x8] sm:$0xff] %v214
    // Predicated region
    $region10: #{_cp_forward_jit.1} parent=1 // pred_check
      _
    $region11: #{_cp_forward_jit.1} parent=1 // pred_check_branch
      %219 = sbr.rel (0) target = $region13
    $region12: #{_cp_forward_jit.1} parent=1 // pred_region
      %s221 = ssub.s32 256, 256
      %222 = vsyncadd [#allocation3], %s221
      %s224 = sshll.u32 [#allocation2], 4
      %s225 = int_to_ptr.vmem [resolvable:$true] %s224
      %227 = dma.vmem_to_hbm [thread:$0]  %s225, 256, %s2, [#allocation3]
    $region13: #{_cp_forward_jit.1} parent=1 // pred_fallthru
      _
    // Predicated region
    $region14: #{_cp_forward_jit.1} parent=1 // pred_check
      _
    $region15: #{_cp_forward_jit.1} parent=1 // pred_check_branch
      %229 = sbr.rel (0) target = $region17
    $region16: #{_cp_forward_jit.1} parent=1 // pred_region
      %230 = dma.done [#allocation3], 256
    $region17: #{_cp_forward_jit.1} parent=1 // pred_fallthru
      _
    %231 = vsyncpa [#allocation3], 1

</llo_original>
